<compile_context>
chip_gen: v5e
topology: v5e:2x2
jax: 0.10.0
libtpu: 0.0.40
codegen_flags: <defaults>
</compile_context>

<pallas_src>
import functools

import jax
import jax.numpy as jnp
from jax.experimental import pallas as pl
from jax.experimental.pallas import tpu as pltpu

_LANES = 128
_SUBLANES = 8
_VMEM_BUDGET_BYTES = 24 << 20   # stay under v7x's 32 MiB scoped-VMEM default


def _round_up(n, m):
    return ((n + m - 1) // m) * m


# --------------------------------------------------------------------------
# Kernel
# --------------------------------------------------------------------------
def _mlp_kernel(num_hidden, x_ref, *refs):
    """refs = (w0, b0, ..., w_{L-1}, b_{L-1}, w_final_row, out_ref)."""
    out_ref = refs[-1]
    params = refs[:-1]

    h = x_ref[...]                                     # (tm, f_in), X dtype
    for layer in range(num_hidden):
        w = params[2 * layer][...]                     # (K, H_pad), compute dtype
        b = params[2 * layer + 1][...]                 # (1, H_pad), f32
        h = jnp.dot(h.astype(w.dtype), w,              # MXU, f32 accumulation
                    preferred_element_type=jnp.float32) + b
        h = jnp.maximum(h, 0.0)                        # ReLU (VPU)

    # Final Linear(H, 1), emitted lane-dense:
    #   (tm, H) -> transpose (clean: tm, H are multiples of 128) -> (H, tm),
    #   then a standard (1, H) @ (H, tm) MXU matmul gives the per-row result
    #   directly as a (1, tm) row -> unmasked lane-dense store, 4 B/row HBM.
    w_f = params[2 * num_hidden][...]                  # (1, H), f32
    ht = jnp.transpose(h)                              # (H, tm), f32 (XLU, idle slot)
    out_ref[...] = jnp.dot(w_f, ht, preferred_element_type=jnp.float32)


# --------------------------------------------------------------------------
# Parameter preparation (hoisted out of the per-call path)
# --------------------------------------------------------------------------
def _prepare_params(weights, biases, data_size, time_size, compute_dtype):
    """Fold DropFirstValue into W0, pad hidden widths to 128 lanes, store
    hidden weights in compute_dtype (biases / final layer stay f32), and
    transpose the final weight into a (1, H) row."""
    num_hidden = len(weights) - 1
    f_in = time_size * (data_size + 1)

    # DropFirstValue fusion: zero row at index t*(D+1) (the dropped channel)
    # for every time step t; remaining rows map to the original T*D features.
    w_first = jnp.asarray(weights[0], jnp.float32)
    out_w = w_first.shape[1]
    w_first = jnp.pad(w_first.reshape(time_size, data_size, out_w),
                      ((0, 0), (1, 0), (0, 0))).reshape(f_in, out_w)
    exp_weights = [w_first] + [jnp.asarray(w, jnp.float32) for w in weights[1:]]

    flat_params = []
    in_dim = f_in
    for layer in range(num_hidden):
        w = exp_weights[layer]
        b = jnp.asarray(biases[layer], jnp.float32).reshape(1, -1)
        h_pad = _round_up(w.shape[1], _LANES)
        w = jnp.pad(w, ((0, in_dim - w.shape[0]), (0, h_pad - w.shape[1])))
        b = jnp.pad(b, ((0, 0), (0, h_pad - b.shape[1])))
        flat_params.append(w.astype(compute_dtype))    # MXU operand
        flat_params.append(b)                          # bias stays f32
        in_dim = h_pad

    # Final Linear(in_dim, 1) as a (1, in_dim) f32 row (lhs of the lane-dense
    # final matmul in the kernel).  Zero-padded rows multiply zero activations.
    w_f = exp_weights[num_hidden]
    w_f = jnp.pad(w_f, ((0, in_dim - w_f.shape[0]), (0, 0))).T
    flat_params.append(w_f)

    b_final = jnp.asarray(biases[num_hidden], jnp.float32).reshape(1, 1)
    return flat_params, b_final


def _choose_tm(batch, f_in, h_pad, x_itemsize, block_m):
    """Batch tile: as large as block_m / the padded batch / the VMEM budget
    allow, multiple of 128 (so the (1, tm) output block is lane-dense)."""
    # per-row VMEM: double-buffered input tile + ~2 live f32 activation copies
    # + (1, tm) f32 output (double-buffered).
    per_row = 2 * f_in * x_itemsize + 2 * h_pad * 4 + 8
    cap_rows = _VMEM_BUDGET_BYTES // max(per_row, 1)
    b128 = _round_up(batch, _LANES)
    tm = min(_round_up(block_m, _LANES), b128, max(cap_rows, _LANES))
    return max(_LANES, (tm // _LANES) * _LANES)


# --------------------------------------------------------------------------
# Forward
# --------------------------------------------------------------------------
def _forward(X, flat_params, b_final, num_hidden, block_m):
    B, T, d_plus_1 = X.shape
    f_in = T * d_plus_1

    # DropFirstValue lives in W0's zero rows -> consume X via a no-copy reshape.
    x = X.reshape(B, f_in)

    h_pad = max(p.shape[-1] for p in flat_params)
    tm = _choose_tm(B, f_in, h_pad, x.dtype.itemsize, block_m)
    b_pad = _round_up(B, tm)
    if b_pad != B:                       # only ragged batches pay for a pad copy
        x = jnp.pad(x, ((0, b_pad - B), (0, 0)))
    grid = (b_pad // tm,)

    in_specs = [pl.BlockSpec((tm, f_in), lambda i: (i, 0))]
    # Weights/biases: full-array blocks with constant index_map -> DMA'd once,
    # VMEM-resident across all grid steps.
    in_specs += [pl.BlockSpec(p.shape, lambda i: (0, 0)) for p in flat_params]

    out = pl.pallas_call(
        functools.partial(_mlp_kernel, num_hidden),
        out_shape=jax.ShapeDtypeStruct((1, b_pad), jnp.float32),
        grid=grid,
        in_specs=in_specs,
        out_specs=pl.BlockSpec((1, tm), lambda i: (0, i)),
        compiler_params=pltpu.CompilerParams(
            dimension_semantics=("parallel",)),
    )(x, *flat_params)

    # The (1,1) final bias is added here instead of occupying a padded VMEM tile.
    return out[0, :B].reshape(B, 1) + b_final


def make_discriminator_forward(weights, biases, *, data_size, time_size,
                               compute_dtype=jnp.bfloat16, block_m=1024):
    """Build a jitted forward with all parameter prep hoisted out of the call."""
    num_hidden = len(weights) - 1
    if num_hidden == 0:
        # Degenerate config (no hidden layer): a single matvec, plain XLA is
        # already optimal.  # TODO(synk): not worth a dedicated Pallas kernel.
        w = jnp.asarray(weights[0], jnp.float32)
        b = jnp.asarray(biases[0], jnp.float32).reshape(1, 1)

        def fwd0(X):
            return X[..., 1:].reshape(X.shape[0], -1) @ w + b
        return jax.jit(fwd0)

    flat_params, b_final = _prepare_params(weights, biases, data_size,
                                           time_size, compute_dtype)

    def fwd(X):
        return _forward(X, flat_params, b_final, num_hidden, block_m)

    return jax.jit(fwd)


def discriminator_simple_forward(X, weights, biases, *,
                                 compute_dtype=jnp.bfloat16, block_m=1024):
    """One-shot convenience wrapper (prep not hoisted)."""
    B, T, d_plus_1 = X.shape
    fwd = make_discriminator_forward(weights, biases, data_size=d_plus_1 - 1,
                                     time_size=T, compute_dtype=compute_dtype,
                                     block_m=block_m)
    return fwd(X)


# --------------------------------------------------------------------------
# Init + reference
# --------------------------------------------------------------------------
def init_params(key, data_size, time_size, num_layers, num_units):
    """Deterministic synthetic init (same shapes as the torch module,
    weights stored transposed: (in_features, out_features))."""
    sizes = []
    last = data_size * time_size
    for _ in range(num_layers):
        sizes.append((last, num_units))
        last = num_units
    sizes.append((last, 1))

    weights, biases = [], []
    for fan_in, fan_out in sizes:
        key, kw, kb = jax.random.split(key, 3)
        bound = 1.0 / jnp.sqrt(fan_in)
        w = jax.random.uniform(kw, (fan_in, fan_out), jnp.float32, -bound, bound)
        b = jax.random.uniform(kb, (1, fan_out), jnp.float32, -bound, bound)
        weights.append(w)
        biases.append(b)
    return weights, biases


def _reference_forward(X, weights, biases):
    """Pure-JAX reference (full-precision matmuls) for correctness checking."""
    B = X.shape[0]
    x = X[..., 1:].reshape(B, -1)
    h = x
    for w, b in zip(weights[:-1], biases[:-1]):
        h = jnp.maximum(
            jnp.dot(h, w, precision=jax.lax.Precision.HIGHEST) + b, 0.0)
    return jnp.dot(h, weights[-1], precision=jax.lax.Precision.HIGHEST) + biases[-1]


# --------------------------------------------------------------------------
# Self-test
# --------------------------------------------------------------------------
if __name__ == "__main__":
    # data_size=4, time_size=8 -> flattened features = 32 (40 after drop fusion)
    data_size, time_size = 4, 8
    num_layers, num_units = 2, 32

    key = jax.random.PRNGKey(0)
    key, kp = jax.random.split(key)
    weights, biases = init_params(kp, data_size, time_size, num_layers, num_units)

    # --- check 1: small batch, f32 compute, single grid step ---
    batch = 8
    key, kx = jax.random.split(key)
    X = jax.random.normal(kx, (batch, time_size, data_size + 1), jnp.float32)
    fwd_f32 = make_discriminator_forward(weights, biases,
                                         data_size=data_size,
                                         time_size=time_size,
                                         compute_dtype=jnp.float32)
    out = jax.block_until_ready(fwd_f32(X))
    ref = _reference_forward(X, weights, biases)
    assert out.shape == (batch, 1)
    assert jnp.allclose(out, ref, atol=2e-3, rtol=2e-3), \
        float(jnp.max(jnp.abs(out - ref)))

    # --- check 2: default bf16 compute path (loose tolerance) ---
    fwd_bf16 = make_discriminator_forward(weights, biases,
                                          data_size=data_size,
                                          time_size=time_size)
    out_bf16 = jax.block_until_ready(fwd_bf16(X))
    assert out_bf16.shape == (batch, 1)
    assert jnp.allclose(out_bf16, ref, atol=5e-2, rtol=0), \
        float(jnp.max(jnp.abs(out_bf16 - ref)))

    # --- check 3: ragged batch + multi-step grid (block_m=128 -> grid=(2,)) ---
    batch2 = 200
    key, kx2 = jax.random.split(key)
    X2 = jax.random.normal(kx2, (batch2, time_size, data_size + 1), jnp.float32)
    fwd_small = make_discriminator_forward(weights, biases,
                                           data_size=data_size,
                                           time_size=time_size,
                                           compute_dtype=jnp.float32,
                                           block_m=128)
    out2 = jax.block_until_ready(fwd_small(X2))
    ref2 = _reference_forward(X2, weights, biases)
    assert out2.shape == (batch2, 1)
    assert jnp.allclose(out2, ref2, atol=2e-3, rtol=2e-3), \
        float(jnp.max(jnp.abs(out2 - ref2)))

    print("KERNEL_OK")
</pallas_src>

<mosaic_0001>
module attributes {stable_mosaic.version = 11 : i64} {
  func.func @_mlp_kernel(%arg0: i32, %arg1: memref<128x40xf32, #tpu.memory_space<vmem>>, %arg2: memref<40x128xf32, #tpu.memory_space<vmem>>, %arg3: memref<1x128xf32, #tpu.memory_space<vmem>>, %arg4: memref<128x128xf32, #tpu.memory_space<vmem>>, %arg5: memref<1x128xf32, #tpu.memory_space<vmem>>, %arg6: memref<1x128xf32, #tpu.memory_space<vmem>>, %arg7: memref<1x128xf32, #tpu.memory_space<vmem>>) attributes {dimension_semantics = [#tpu.dimension_semantics<parallel>], iteration_bounds = array<i64: 1>, scalar_prefetch = 0 : i64, scratch_operands = 0 : i64, tpu.core_type = #tpu.core_type<tc>, window_params = [{transform_indices = @transform_0, window_bounds = array<i64: 128, 40>}, {pipeline_mode = #tpu.pipeline_mode<synchronous>, transform_indices = @transform_1, window_bounds = array<i64: 40, 128>}, {pipeline_mode = #tpu.pipeline_mode<synchronous>, transform_indices = @transform_2, window_bounds = array<i64: 1, 128>}, {pipeline_mode = #tpu.pipeline_mode<synchronous>, transform_indices = @transform_3, window_bounds = array<i64: 128, 128>}, {pipeline_mode = #tpu.pipeline_mode<synchronous>, transform_indices = @transform_4, window_bounds = array<i64: 1, 128>}, {pipeline_mode = #tpu.pipeline_mode<synchronous>, transform_indices = @transform_5, window_bounds = array<i64: 1, 128>}, {transform_indices = @transform_6, window_bounds = array<i64: 1, 128>}]} {
    %c0 = arith.constant 0 : index
    %c0_0 = arith.constant 0 : index
    %0 = vector.load %arg1[%c0, %c0_0] : memref<128x40xf32, #tpu.memory_space<vmem>>, vector<128x40xf32>
    %c0_1 = arith.constant 0 : index
    %c0_2 = arith.constant 0 : index
    %1 = vector.load %arg2[%c0_1, %c0_2] : memref<40x128xf32, #tpu.memory_space<vmem>>, vector<40x128xf32>
    %c0_3 = arith.constant 0 : index
    %c0_4 = arith.constant 0 : index
    %2 = vector.load %arg3[%c0_3, %c0_4] : memref<1x128xf32, #tpu.memory_space<vmem>>, vector<1x128xf32>
    %cst = arith.constant dense<0.000000e+00> : vector<128x128xf32>
    %3 = tpu.matmul %0, %1, %cst {dimension_numbers = #tpu.dot_dimension_numbers<[1], [0], [0], [1], [0, 0, 1, 1], [], []>} : vector<128x40xf32>, vector<40x128xf32>, vector<128x128xf32> -> vector<128x128xf32>
    %4 = vector.broadcast %2 : vector<1x128xf32> to vector<128x128xf32>
    %5 = arith.addf %3, %4 : vector<128x128xf32>
    %cst_5 = arith.constant 0.000000e+00 : f32
    %6 = vector.broadcast %cst_5 : f32 to vector<128x128xf32>
    %7 = arith.maximumf %5, %6 : vector<128x128xf32>
    %c0_6 = arith.constant 0 : index
    %c0_7 = arith.constant 0 : index
    %8 = vector.load %arg4[%c0_6, %c0_7] : memref<128x128xf32, #tpu.memory_space<vmem>>, vector<128x128xf32>
    %c0_8 = arith.constant 0 : index
    %c0_9 = arith.constant 0 : index
    %9 = vector.load %arg5[%c0_8, %c0_9] : memref<1x128xf32, #tpu.memory_space<vmem>>, vector<1x128xf32>
    %cst_10 = arith.constant dense<0.000000e+00> : vector<128x128xf32>
    %10 = tpu.matmul %7, %8, %cst_10 {dimension_numbers = #tpu.dot_dimension_numbers<[1], [0], [0], [1], [0, 0, 1, 1], [], []>} : vector<128x128xf32>, vector<128x128xf32>, vector<128x128xf32> -> vector<128x128xf32>
    %11 = vector.broadcast %9 : vector<1x128xf32> to vector<128x128xf32>
    %12 = arith.addf %10, %11 : vector<128x128xf32>
    %cst_11 = arith.constant 0.000000e+00 : f32
    %13 = vector.broadcast %cst_11 : f32 to vector<128x128xf32>
    %14 = arith.maximumf %12, %13 : vector<128x128xf32>
    %c0_12 = arith.constant 0 : index
    %c0_13 = arith.constant 0 : index
    %15 = vector.load %arg6[%c0_12, %c0_13] : memref<1x128xf32, #tpu.memory_space<vmem>>, vector<1x128xf32>
    %16 = tpu.transpose %14, [1, 0] : vector<128x128xf32> -> vector<128x128xf32>
    %cst_14 = arith.constant dense<0.000000e+00> : vector<1x128xf32>
    %17 = tpu.matmul %15, %16, %cst_14 {dimension_numbers = #tpu.dot_dimension_numbers<[1], [0], [0], [1], [0, 0, 1, 1], [], []>} : vector<1x128xf32>, vector<128x128xf32>, vector<1x128xf32> -> vector<1x128xf32>
    %c0_15 = arith.constant 0 : index
    %c0_16 = arith.constant 0 : index
    %18 = vector.load %arg7[%c0_15, %c0_16] : memref<1x128xf32, #tpu.memory_space<vmem>>, vector<1x128xf32>
    tpu.vector_store %arg7[%c0_15, %c0_16], %17 {strides = array<i32>} : memref<1x128xf32, #tpu.memory_space<vmem>>, vector<1x128xf32>,
    return
  }
  func.func @transform_0(%arg0: i32) -> (i32, i32) {
    %c0_i32 = arith.constant 0 : i32
    %c0_i32_0 = arith.constant 0 : i32
    return %arg0, %c0_i32 : i32, i32
  }
  func.func @transform_1(%arg0: i32) -> (i32, i32) {
    %c0_i32 = arith.constant 0 : i32
    %c0_i32_0 = arith.constant 0 : i32
    %c0_i32_1 = arith.constant 0 : i32
    return %c0_i32, %c0_i32_0 : i32, i32
  }
  func.func @transform_2(%arg0: i32) -> (i32, i32) {
    %c0_i32 = arith.constant 0 : i32
    %c0_i32_0 = arith.constant 0 : i32
    %c0_i32_1 = arith.constant 0 : i32
    return %c0_i32, %c0_i32_0 : i32, i32
  }
  func.func @transform_3(%arg0: i32) -> (i32, i32) {
    %c0_i32 = arith.constant 0 : i32
    %c0_i32_0 = arith.constant 0 : i32
    %c0_i32_1 = arith.constant 0 : i32
    return %c0_i32, %c0_i32_0 : i32, i32
  }
  func.func @transform_4(%arg0: i32) -> (i32, i32) {
    %c0_i32 = arith.constant 0 : i32
    %c0_i32_0 = arith.constant 0 : i32
    %c0_i32_1 = arith.constant 0 : i32
    return %c0_i32, %c0_i32_0 : i32, i32
  }
  func.func @transform_5(%arg0: i32) -> (i32, i32) {
    %c0_i32 = arith.constant 0 : i32
    %c0_i32_0 = arith.constant 0 : i32
    %c0_i32_1 = arith.constant 0 : i32
    return %c0_i32, %c0_i32_0 : i32, i32
  }
  func.func @transform_6(%arg0: i32) -> (i32, i32) {
    %c0_i32 = arith.constant 0 : i32
    %c0_i32_0 = arith.constant 0 : i32
    return %c0_i32, %arg0 : i32, i32
  }
}

</mosaic_0001>

<llo_original>
// kernel: fwd.1
$region0: #{fwd.1}
  #allocation0 [shape = 'u32[]', space=smem, size = 0x4, offset = 0x4, fixed_abs, tag = 'smem constant byte address 0x4 - core index']
  #allocation1 [shape = 'u32[72,128]{1,0:T(1,128)}', space=vmem, size = 0x9000, scoped, tag = 'internal scratch']
  %s0 = inlined_call_operand.vmem [shape: f32[128,40], index: 0, kind: input, shape index: {}]
  %s1 = inlined_call_operand.vmem [shape: f32[40,128], index: 1, kind: input, shape index: {}]
  %s2 = inlined_call_operand.vmem [shape: f32[1,128], index: 2, kind: input, shape index: {}]
  %s3 = inlined_call_operand.vmem [shape: f32[128,128], index: 3, kind: input, shape index: {}]
  %s4 = inlined_call_operand.vmem [shape: f32[1,128], index: 4, kind: input, shape index: {}]
  %s5 = inlined_call_operand.vmem [shape: f32[1,128], index: 5, kind: input, shape index: {}]
  %s6 = inlined_call_operand.vmem [shape: f32[1,128], index: 6, kind: output, shape index: {}]
  %s7 = sld [smem:[#allocation0]]
  $region34: #{fwd.1} parent=0
    _
  %s9 = ssub.s32 1, %s7
  %s10 = scalar_select 0, %s9, %s7
  // Predicated region
  $region2: #{fwd.1} parent=0 // pred_check
    _
  $region3: #{fwd.1} parent=0 // pred_check_branch
    %12 = sbr.rel (0) target = $region5
  $region4: #{fwd.1} parent=0 // pred_region
    _
  $region5: #{fwd.1} parent=0 // pred_fallthru
    _
  // Predicated region
  $region6: #{fwd.1} parent=0 // pred_check
    _
  $region7: #{fwd.1} parent=0 // pred_check_branch
    %14 = sbr.rel (0) target = $region9
  $region8: #{fwd.1} parent=0 // pred_region
    _
  $region9: #{fwd.1} parent=0 // pred_fallthru
    _
  // Predicated region
  $region10: #{fwd.1} parent=0 // pred_check
    _
  $region11: #{fwd.1} parent=0 // pred_check_branch
    %16 = sbr.rel (0) target = $region13
  $region12: #{fwd.1} parent=0 // pred_region
    _
  $region13: #{fwd.1} parent=0 // pred_fallthru
    _
  // Predicated region
  $region14: #{fwd.1} parent=0 // pred_check
    _
  $region15: #{fwd.1} parent=0 // pred_check_branch
    %18 = sbr.rel (0) target = $region17
  $region16: #{fwd.1} parent=0 // pred_region
    _
  $region17: #{fwd.1} parent=0 // pred_fallthru
    _
  // Predicated region
  $region18: #{fwd.1} parent=0 // pred_check
    _
  $region19: #{fwd.1} parent=0 // pred_check_branch
    %20 = sbr.rel (0) target = $region21
  $region20: #{fwd.1} parent=0 // pred_region
    _
  $region21: #{fwd.1} parent=0 // pred_fallthru
    _
  // Predicated region
  $region22: #{fwd.1} parent=0 // pred_check
    _
  $region23: #{fwd.1} parent=0 // pred_check_branch
    %22 = sbr.rel (0) target = $region25
  $region24: #{fwd.1} parent=0 // pred_region
    _
  $region25: #{fwd.1} parent=0 // pred_fallthru
    _
  %v23 = vld [vmem:[%s0] sm:$0xff]
  %v24 = vld [vmem:[%s0 + $0x8] sm:$0xff]
  %v25 = vld [vmem:[%s0 + $0x10] sm:$0xff]
  %v26 = vld [vmem:[%s0 + $0x18] sm:$0xff]
  %v27 = vld [vmem:[%s0 + $0x20] sm:$0xff]
  %v28 = vld [vmem:[%s0 + $0x28] sm:$0xff]
  %v29 = vld [vmem:[%s0 + $0x30] sm:$0xff]
  %v30 = vld [vmem:[%s0 + $0x38] sm:$0xff]
  %v31 = vld [vmem:[%s0 + $0x40] sm:$0xff]
  %v32 = vld [vmem:[%s0 + $0x48] sm:$0xff]
  %v33 = vld [vmem:[%s0 + $0x50] sm:$0xff]
  %v34 = vld [vmem:[%s0 + $0x58] sm:$0xff]
  %v35 = vld [vmem:[%s0 + $0x60] sm:$0xff]
  %v36 = vld [vmem:[%s0 + $0x68] sm:$0xff]
  %v37 = vld [vmem:[%s0 + $0x70] sm:$0xff]
  %v38 = vld [vmem:[%s0 + $0x78] sm:$0xff]
  %v39 = vld [vmem:[%s1] sm:$0xff]
  %v40 = vld [vmem:[%s1 + $0x8] sm:$0xff]
  %v41 = vld [vmem:[%s1 + $0x10] sm:$0xff]
  %v42 = vld [vmem:[%s1 + $0x18] sm:$0xff]
  %v43 = vld [vmem:[%s1 + $0x20] sm:$0xff]
  %v44 = vld [vmem:[%s2] sm:$0x1]
  %v46 = vperm.slane %v44, 0
  %vm48 = vcmask 326656
  %v50 = vsel %vm48, %v23, 0
  %v53 = vsel %vm48, %v24, 0
  %v56 = vsel %vm48, %v25, 0
  %v59 = vsel %vm48, %v26, 0
  %v62 = vsel %vm48, %v27, 0
  %v65 = vsel %vm48, %v28, 0
  %v68 = vsel %vm48, %v29, 0
  %v71 = vsel %vm48, %v30, 0
  %v74 = vsel %vm48, %v31, 0
  %v77 = vsel %vm48, %v32, 0
  %v80 = vsel %vm48, %v33, 0
  %v83 = vsel %vm48, %v34, 0
  %v86 = vsel %vm48, %v35, 0
  %v89 = vsel %vm48, %v36, 0
  %v92 = vsel %vm48, %v37, 0
  %v95 = vsel %vm48, %v38, 0
  %97 = vmatpush.msra.mxu0 0.0
  %98 = vmatpush.msra.mxu0 0.0
  %99 = vmatpush.msra.mxu0 0.0
  %100 = vmatpush.msra.mxu0 0.0
  %101 = vmatpush.msra.mxu0 0.0
  %102 = vmatpush.msra.mxu0 0.0
  %103 = vmatpush.msra.mxu0 0.0
  %104 = vmatpush.msra.mxu0 0.0
  %105 = vmatpush.msra.mxu0 0.0
  %106 = vmatpush.msra.mxu0 0.0
  %107 = vmatpush.msra.mxu0 0.0
  %108 = vmatpush.msra.mxu0 %v43
  %109 = vmatpush.msra.mxu0 %v42
  %110 = vmatpush.msra.mxu0 %v41
  %111 = vmatpush.msra.mxu0 %v40
  %112 = vmatpush.msra.mxu0 %v39
  %113 = vmatmul.f32.gmra.mxu0 %v50
  %v114 = vpop.f32.mrf.mxu0
  %v115 = vadd.f32 %v46, %v114
  %116 = vmatmul.f32.gmra.mxu0 %v53
  %v117 = vpop.f32.mrf.mxu0
  %v118 = vadd.f32 %v46, %v117
  %119 = vmatmul.f32.gmra.mxu0 %v56
  %v120 = vpop.f32.mrf.mxu0
  %v121 = vadd.f32 %v46, %v120
  %122 = vmatmul.f32.gmra.mxu0 %v59
  %v123 = vpop.f32.mrf.mxu0
  %v124 = vadd.f32 %v46, %v123
  %125 = vmatmul.f32.gmra.mxu0 %v62
  %v126 = vpop.f32.mrf.mxu0
  %v127 = vadd.f32 %v46, %v126
  %128 = vmatmul.f32.gmra.mxu0 %v65
  %v129 = vpop.f32.mrf.mxu0
  %v130 = vadd.f32 %v46, %v129
  %131 = vmatmul.f32.gmra.mxu0 %v68
  %v132 = vpop.f32.mrf.mxu0
  %v133 = vadd.f32 %v46, %v132
  %134 = vmatmul.f32.gmra.mxu0 %v71
  %v135 = vpop.f32.mrf.mxu0
  %v136 = vadd.f32 %v46, %v135
  %137 = vmatmul.f32.gmra.mxu0 %v74
  %v138 = vpop.f32.mrf.mxu0
  %v139 = vadd.f32 %v46, %v138
  %140 = vmatmul.f32.gmra.mxu0 %v77
  %v141 = vpop.f32.mrf.mxu0
  %v142 = vadd.f32 %v46, %v141
  %143 = vmatmul.f32.gmra.mxu0 %v80
  %v144 = vpop.f32.mrf.mxu0
  %v145 = vadd.f32 %v46, %v144
  %146 = vmatmul.f32.gmra.mxu0 %v83
  %v147 = vpop.f32.mrf.mxu0
  %v148 = vadd.f32 %v46, %v147
  %149 = vmatmul.f32.gmra.mxu0 %v86
  %v150 = vpop.f32.mrf.mxu0
  %v151 = vadd.f32 %v46, %v150
  %152 = vmatmul.f32.gmra.mxu0 %v89
  %v153 = vpop.f32.mrf.mxu0
  %v154 = vadd.f32 %v46, %v153
  %155 = vmatmul.f32.gmra.mxu0 %v92
  %v156 = vpop.f32.mrf.mxu0
  %v157 = vadd.f32 %v46, %v156
  %158 = vmatmul.f32.gmra.mxu0 %v95
  %v159 = vpop.f32.mrf.mxu0
  %v160 = vadd.f32 %v46, %v159
  %161 = vdwg.mxu0
  %v162 = vmax.f32 %v115, 0.0
  %v163 = vmax.f32 %v118, 0.0
  %v164 = vmax.f32 %v121, 0.0
  %v165 = vmax.f32 %v124, 0.0
  %v166 = vmax.f32 %v127, 0.0
  %v167 = vmax.f32 %v130, 0.0
  %v168 = vmax.f32 %v133, 0.0
  %v169 = vmax.f32 %v136, 0.0
  %v170 = vmax.f32 %v139, 0.0
  %v171 = vmax.f32 %v142, 0.0
  %v172 = vmax.f32 %v145, 0.0
  %v173 = vmax.f32 %v148, 0.0
  %v174 = vmax.f32 %v151, 0.0
  %v175 = vmax.f32 %v154, 0.0
  %v176 = vmax.f32 %v157, 0.0
  %v177 = vmax.f32 %v160, 0.0
  %v178 = vld [vmem:[%s3] sm:$0xff]
  %v179 = vld [vmem:[%s3 + $0x8] sm:$0xff]
  %v180 = vld [vmem:[%s3 + $0x10] sm:$0xff]
  %v181 = vld [vmem:[%s3 + $0x18] sm:$0xff]
  %v182 = vld [vmem:[%s3 + $0x20] sm:$0xff]
  %v183 = vld [vmem:[%s3 + $0x28] sm:$0xff]
  %v184 = vld [vmem:[%s3 + $0x30] sm:$0xff]
  %v185 = vld [vmem:[%s3 + $0x38] sm:$0xff]
  %v186 = vld [vmem:[%s3 + $0x40] sm:$0xff]
  %v187 = vld [vmem:[%s3 + $0x48] sm:$0xff]
  %v188 = vld [vmem:[%s3 + $0x50] sm:$0xff]
  %v189 = vld [vmem:[%s3 + $0x58] sm:$0xff]
  %v190 = vld [vmem:[%s3 + $0x60] sm:$0xff]
  %v191 = vld [vmem:[%s3 + $0x68] sm:$0xff]
  %v192 = vld [vmem:[%s3 + $0x70] sm:$0xff]
  %v193 = vld [vmem:[%s3 + $0x78] sm:$0xff]
  %v194 = vld [vmem:[%s4] sm:$0x1]
  %v196 = vperm.slane %v194, 0
  %198 = vmatpush.msra.mxu0 %v193
  %199 = vmatpush.msra.mxu0 %v192
  %200 = vmatpush.msra.mxu0 %v191
  %201 = vmatpush.msra.mxu0 %v190
  %202 = vmatpush.msra.mxu0 %v189
  %203 = vmatpush.msra.mxu0 %v188
  %204 = vmatpush.msra.mxu0 %v187
  %205 = vmatpush.msra.mxu0 %v186
  %206 = vmatpush.msra.mxu0 %v185
  %207 = vmatpush.msra.mxu0 %v184
  %208 = vmatpush.msra.mxu0 %v183
  %209 = vmatpush.msra.mxu0 %v182
  %210 = vmatpush.msra.mxu0 %v181
  %211 = vmatpush.msra.mxu0 %v180
  %212 = vmatpush.msra.mxu0 %v179
  %213 = vmatpush.msra.mxu0 %v178
  %214 = vmatmul.f32.gmra.mxu0 %v162
  %v215 = vpop.f32.mrf.mxu0
  %v216 = vadd.f32 %v196, %v215
  %217 = vmatmul.f32.gmra.mxu0 %v163
  %v218 = vpop.f32.mrf.mxu0
  %v219 = vadd.f32 %v196, %v218
  %220 = vmatmul.f32.gmra.mxu0 %v164
  %v221 = vpop.f32.mrf.mxu0
  %v222 = vadd.f32 %v196, %v221
  %223 = vmatmul.f32.gmra.mxu0 %v165
  %v224 = vpop.f32.mrf.mxu0
  %v225 = vadd.f32 %v196, %v224
  %226 = vmatmul.f32.gmra.mxu0 %v166
  %v227 = vpop.f32.mrf.mxu0
  %v228 = vadd.f32 %v196, %v227
  %229 = vmatmul.f32.gmra.mxu0 %v167
  %v230 = vpop.f32.mrf.mxu0
  %v231 = vadd.f32 %v196, %v230
  %232 = vmatmul.f32.gmra.mxu0 %v168
  %v233 = vpop.f32.mrf.mxu0
  %v234 = vadd.f32 %v196, %v233
  %235 = vmatmul.f32.gmra.mxu0 %v169
  %v236 = vpop.f32.mrf.mxu0
  %v237 = vadd.f32 %v196, %v236
  %238 = vmatmul.f32.gmra.mxu0 %v170
  %v239 = vpop.f32.mrf.mxu0
  %v240 = vadd.f32 %v196, %v239
  %241 = vmatmul.f32.gmra.mxu0 %v171
  %v242 = vpop.f32.mrf.mxu0
  %v243 = vadd.f32 %v196, %v242
  %244 = vmatmul.f32.gmra.mxu0 %v172
  %v245 = vpop.f32.mrf.mxu0
  %v246 = vadd.f32 %v196, %v245
  %247 = vmatmul.f32.gmra.mxu0 %v173
  %v248 = vpop.f32.mrf.mxu0
  %v249 = vadd.f32 %v196, %v248
  %250 = vmatmul.f32.gmra.mxu0 %v174
  %v251 = vpop.f32.mrf.mxu0
  %v252 = vadd.f32 %v196, %v251
  %253 = vmatmul.f32.gmra.mxu0 %v175
  %v254 = vpop.f32.mrf.mxu0
  %v255 = vadd.f32 %v196, %v254
  %256 = vmatmul.f32.gmra.mxu0 %v176
  %v257 = vpop.f32.mrf.mxu0
  %v258 = vadd.f32 %v196, %v257
  %259 = vmatmul.f32.gmra.mxu0 %v177
  %v260 = vpop.f32.mrf.mxu0
  %v261 = vadd.f32 %v196, %v260
  %262 = vdwg.mxu0
  %v263 = vmax.f32 %v216, 0.0
  %v264 = vmax.f32 %v219, 0.0
  %v265 = vmax.f32 %v222, 0.0
  %v266 = vmax.f32 %v225, 0.0
  %v267 = vmax.f32 %v228, 0.0
  %v268 = vmax.f32 %v231, 0.0
  %v269 = vmax.f32 %v234, 0.0
  %v270 = vmax.f32 %v237, 0.0
  %v271 = vmax.f32 %v240, 0.0
  %v272 = vmax.f32 %v243, 0.0
  %v273 = vmax.f32 %v246, 0.0
  %v274 = vmax.f32 %v249, 0.0
  %v275 = vmax.f32 %v252, 0.0
  %v276 = vmax.f32 %v255, 0.0
  %v277 = vmax.f32 %v258, 0.0
  %v278 = vmax.f32 %v261, 0.0
  %v279 = vld [vmem:[%s5] sm:$0x1]
  %280 = vmatpush.xpose.msra.mxu0 %v278
  %281 = vmatpush.xpose.msra.mxu0 %v277
  %282 = vmatpush.xpose.msra.mxu0 %v276
  %283 = vmatpush.xpose.msra.mxu0 %v275
  %284 = vmatpush.xpose.msra.mxu0 %v274
  %285 = vmatpush.xpose.msra.mxu0 %v273
  %286 = vmatpush.xpose.msra.mxu0 %v272
  %287 = vmatpush.xpose.msra.mxu0 %v271
  %288 = vmatpush.xpose.msra.mxu0 %v270
  %289 = vmatpush.xpose.msra.mxu0 %v269
  %290 = vmatpush.xpose.msra.mxu0 %v268
  %291 = vmatpush.xpose.msra.mxu0 %v267
  %292 = vmatpush.xpose.msra.mxu0 %v266
  %293 = vmatpush.xpose.msra.mxu0 %v265
  %294 = vmatpush.xpose.msra.mxu0 %v264
  %295 = vmatpush.xpose.msra.mxu0 %v263
  %296 = vmatmul.f32.gmra.mxu0 %v279
  %v297 = vpop.f32.mrf.mxu0
  %v298 = vadd.f32 0.0, %v297
  %299 = vdwg.mxu0
  %300 = vst [vmem:[%s6] sm:$0x1] %v298
  // Predicated region
  $region26: #{fwd.1} parent=0 // pred_check
    _
  $region27: #{fwd.1} parent=0 // pred_check_branch
    %302 = sbr.rel (0) target = $region29
  $region28: #{fwd.1} parent=0 // pred_region
    _
  $region29: #{fwd.1} parent=0 // pred_fallthru
    _
  // Predicated region
  $region30: #{fwd.1} parent=0 // pred_check
    _
  $region31: #{fwd.1} parent=0 // pred_check_branch
    %304 = sbr.rel (0) target = $region33
  $region32: #{fwd.1} parent=0 // pred_region
    _
  $region33: #{fwd.1} parent=0 // pred_fallthru
    _

</llo_original>
